<compile_context>
chip_gen: v6e
topology: v6e:2x2x1
jax: 0.10.0
libtpu: 0.0.40
codegen_flags: <defaults>
</compile_context>

<pallas_src>
import math
import functools

import jax
import jax.numpy as jnp
from jax.experimental import pallas as pl
from jax.experimental.pallas import tpu as pltpu


def _round_up(x, m):
    return ((x + m - 1) // m) * m


def _vmem_capacity_bytes():
    """Generation-aware physical VMEM per TensorCore (v5e/v6e: 128 MiB, v7x: 64 MiB)."""
    try:
        info = pltpu.get_tpu_info()
        cap = getattr(info, "vmem_capacity_bytes", None)
        if cap:
            return int(cap)
    except Exception:
        pass
    return 64 * 2 ** 20  # conservative fallback (v7x per-TC)


def _styled_conv_down_kernel(x_ref, w_ref, s_ref, d_ref, noise_ref, abias_ref,
                             nw_ref, o_ref, *, cin, ke, wh, pj, tap_groups,
                             neg_slope, act_gain):
    d = d_ref[0]                                        # (Ct, 1) f32 demod coeff (hoisted)
    acc = None
    # Static, unrolled loop over tap groups: each group is one MXU matmul with
    # contraction G*Cin, accumulated in f32.  Modulation/cast of the weight chunk and
    # the (possibly single-slice) slab copy overlap the previous group's matmul.
    for group in tap_groups:
        lo = group[0] * cin
        hi = (group[-1] + 1) * cin
        # modulate (per-ci style) + demodulate (per-co) just this weight chunk -> bf16
        w_chunk = (w_ref[:, lo:hi].astype(jnp.float32)
                   * s_ref[0, :, lo:hi] * d).astype(jnp.bfloat16)        # (Ct, G*Cin)
        taps = []
        for tap in group:
            a, b = tap // ke, tap % ke
            phase = (a % 2) * 2 + (b % 2)
            off = (a // 2) * wh + (b // 2)
            taps.append(x_ref[0, phase, :, off:off + pj])                # (Cin, PJ) bf16
        slab = taps[0] if len(taps) == 1 else jnp.concatenate(taps, axis=0)
        part = jnp.dot(w_chunk, slab, preferred_element_type=jnp.float32)  # (Ct, PJ) f32
        acc = part if acc is None else acc + part

    # NoiseInjection + FusedLeakyReLU, fused on the VPU
    acc = acc + nw_ref[0, 0] * noise_ref[0]             # (1, PJ) broadcast
    acc = acc + abias_ref[...]                          # (Ct, 1) broadcast
    acc = jnp.where(acc >= 0.0, acc, acc * neg_slope) * act_gain
    o_ref[0] = acc.astype(o_ref.dtype)


def styled_conv_down(x, style, conv_weight, mod_weight, mod_bias,
                     noise, noise_weight, act_bias, *,
                     blur_kernel=(1, 3, 3, 1), eps=1e-8,
                     neg_slope=0.2, act_gain=math.sqrt(2.0)):
    """Forward pass of StyledConv_down.

    x           : (B, Cin, H, W)  f32
    style       : (B, style_dim)  f32
    conv_weight : (1, Cout, Cin, K, K) f32   (ModulatedConv2d.weight)
    mod_weight  : (Cin, style_dim) f32       (EqualLinear.weight of the modulation)
    mod_bias    : (Cin,) f32                 (EqualLinear.bias, bias_init=1)
    noise       : (B, 1, H//2, W//2) f32     (NoiseInjection noise)
    noise_weight: scalar f32                 (NoiseInjection.weight)
    act_bias    : (Cout,) f32                (FusedLeakyReLU.bias)
    returns     : (B, Cout, H//2, W//2) f32
    """
    # TODO(synk): the noise=None branch (fresh torch randn per call) is host-side RNG;
    # this wrapper requires an explicit noise tensor instead.
    B, Cin, H, W = x.shape
    _, Cout, Cin_w, K, K2 = conv_weight.shape
    assert Cin_w == Cin and K == K2
    S = mod_weight.shape[1]
    assert style.shape == (B, S)

    # ---- geometry: blur pad + stride-2 valid conv, folded to one KExKE stride-2 conv ----
    k1 = jnp.asarray(blur_kernel, jnp.float32)
    b2d = k1[None, :] * k1[:, None]
    b2d = b2d / jnp.sum(b2d)
    L = b2d.shape[0]
    p = L - 2 + (K - 1)
    p0, p1 = (p + 1) // 2, p // 2
    Hb, Wb = H + p0 + p1 - L + 1, W + p0 + p1 - L + 1      # blurred size
    H_out, W_out = (Hb - K) // 2 + 1, (Wb - K) // 2 + 1    # stride-2 valid conv output
    Hp, Wp = H + p0 + p1, W + p0 + p1                      # padded input size
    assert Hp % 2 == 0 and Wp % 2 == 0, "polyphase split needs even padded dims"
    Hh, Wh = Hp // 2, Wp // 2
    KE = K + L - 1                                         # folded effective kernel (6)
    n_tap = KE * KE
    T = n_tap * Cin

    # Lane-dense unmasked stores / full-lane MXU N: pad flattened output pixels to 128.
    PJ = _round_up(H_out * Wh, 128)
    max_off = ((KE - 1) // 2) * Wh + (KE - 1) // 2
    FLAT = max_off + PJ                                    # every tap slice stays in-bounds

    # ---- grid-invariant precompute hoisted out of the kernel ----
    scale = 1.0 / math.sqrt(Cin * K * K)
    w0 = scale * conv_weight[0].astype(jnp.float32)        # (Cout, Cin, K, K)
    bflip = jnp.flip(b2d, (0, 1))                          # symmetric for [1,3,3,1]
    weff = jnp.zeros((Cout, Cin, KE, KE), jnp.float32)     # fold blur into the weight
    for ky in range(K):
        for kx in range(K):
            weff = weff.at[:, :, ky:ky + L, kx:kx + L].add(
                w0[:, :, ky, kx, None, None] * bflip[None, None])
    weff_flat = jnp.transpose(weff, (0, 2, 3, 1)).reshape(Cout, T).astype(jnp.bfloat16)

    # EqualLinear style + demodulation coefficient, hoisted to plain JAX (f32).
    s = style.astype(jnp.float32) @ (mod_weight.astype(jnp.float32).T * (1.0 / math.sqrt(S)))
    s = s + mod_bias.astype(jnp.float32)[None, :]                     # (B, Cin)
    ssq = jnp.sum(w0 * w0, axis=(2, 3))                               # (Cout, Cin)
    d = jax.lax.rsqrt((s * s) @ ssq.T + eps)                          # (B, Cout)
    s_tiled = jnp.tile(s, (1, n_tap)).reshape(B, 1, T)                # tap-major, ci-minor
    d_col = d.reshape(B, Cout, 1)

    # ---- input: zero-pad, 2x2 polyphase split, flatten spatial, bf16 ----
    xpad = jnp.pad(x.astype(jnp.float32), ((0, 0), (0, 0), (p0, p1), (p0, p1)))
    xp = xpad.reshape(B, Cin, Hh, 2, Wh, 2)
    xp = jnp.transpose(xp, (0, 3, 5, 1, 2, 4)).reshape(B, 4, Cin, Hh * Wh)
    xp = jnp.pad(xp, ((0, 0), (0, 0), (0, 0), (0, FLAT - Hh * Wh))).astype(jnp.bfloat16)

    noise_flat = jnp.pad(noise.astype(jnp.float32),
                         ((0, 0), (0, 0), (0, 0), (0, Wh - W_out))).reshape(B, 1, H_out * Wh)
    noise_flat = jnp.pad(noise_flat, ((0, 0), (0, 0), (0, PJ - H_out * Wh)))
    abias = act_bias.astype(jnp.float32).reshape(Cout, 1)
    nw = jnp.asarray(noise_weight, jnp.float32).reshape(1, 1)

    # ---- tap grouping: per-tap when Cin>=256 (no concat), else group to contraction ~256 ----
    G = 1 if Cin >= 256 else min(n_tap, -(-256 // Cin))
    tap_groups = tuple(tuple(range(t0, min(t0 + G, n_tap))) for t0 in range(0, n_tap, G))

    # ---- VMEM-budget-driven Cout tiling + generation-aware vmem limit ----
    vmem_cap = _vmem_capacity_bytes()
    budget = int(0.70 * vmem_cap)

    def est_vmem(ct):
        e = 2 * 4 * Cin * FLAT * 2                            # x block (2-buf, bf16)
        e += 2 * ct * T * 2                                   # folded weight block (bf16)
        e += 2 * (T * 4 + ct * 4 + ct * 4 + PJ * 4)           # s_tiled, d, bias, noise
        e += 2 * ct * PJ * 4                                  # output block (f32)
        e += ct * PJ * 4                                      # f32 accumulator
        e += G * Cin * PJ * 2                                 # per-group slab (bf16)
        e += ct * G * Cin * 6                                 # modulated chunk (f32 + bf16)
        return e

    cands = [t for t in (256, 128, 64, 32, 16, 8) if t <= Cout and Cout % t == 0]
    if Cout <= 256 and Cout not in cands:
        cands.insert(0, Cout)
    if not cands:
        cands = [Cout]
    cout_t = cands[-1]
    for tcand in cands:
        if est_vmem(tcand) <= budget:
            cout_t = tcand
            break
    n_cb = Cout // cout_t
    vmem_limit = int(min(int(0.85 * vmem_cap), max(32 * 2 ** 20, 2 * est_vmem(cout_t))))

    # ---- grid order: larger-HBM-footprint operand stays resident across the inner axis ----
    x_bytes = B * 4 * Cin * FLAT * 2
    w_bytes = Cout * T * 2
    batch_outer = (x_bytes + B * w_bytes) <= (w_bytes + n_cb * x_bytes)
    if batch_outer:
        grid = (B, n_cb)
        bj = lambda i0, i1: (i0, i1)       # -> (b, j)
    else:
        grid = (n_cb, B)
        bj = lambda i0, i1: (i1, i0)       # -> (b, j)

    def x_map(i0, i1):
        b, _ = bj(i0, i1); return (b, 0, 0, 0)

    def w_map(i0, i1):
        _, j = bj(i0, i1); return (j, 0)

    def s_map(i0, i1):
        b, _ = bj(i0, i1); return (b, 0, 0)

    def d_map(i0, i1):
        b, j = bj(i0, i1); return (b, j, 0)

    def noise_map(i0, i1):
        b, _ = bj(i0, i1); return (b, 0, 0)

    def bias_map(i0, i1):
        _, j = bj(i0, i1); return (j, 0)

    def out_map(i0, i1):
        b, j = bj(i0, i1); return (b, j, 0)

    kernel = functools.partial(_styled_conv_down_kernel, cin=Cin, ke=KE, wh=Wh, pj=PJ,
                               tap_groups=tap_groups, neg_slope=neg_slope,
                               act_gain=act_gain)

    out_flat = pl.pallas_call(
        kernel,
        out_shape=jax.ShapeDtypeStruct((B, Cout, PJ), jnp.float32),
        grid_spec=pltpu.PrefetchScalarGridSpec(
            num_scalar_prefetch=0,
            grid=grid,
            in_specs=[
                pl.BlockSpec((1, 4, Cin, FLAT), x_map),              # polyphase input (bf16)
                pl.BlockSpec((cout_t, T), w_map),                    # blur-folded weight (bf16)
                pl.BlockSpec((1, 1, T), s_map),                      # per-batch style, tap-tiled
                pl.BlockSpec((1, cout_t, 1), d_map),                 # per-batch demod coeff
                pl.BlockSpec((1, 1, PJ), noise_map),                 # noise
                pl.BlockSpec((cout_t, 1), bias_map),                 # leaky-relu bias
                pl.BlockSpec(memory_space=pltpu.MemorySpace.SMEM),   # noise weight (scalar)
            ],
            out_specs=pl.BlockSpec((1, cout_t, PJ), out_map),
        ),
        compiler_params=pltpu.CompilerParams(
            dimension_semantics=("parallel", "parallel"),
            vmem_limit_bytes=vmem_limit),
    )(xp, weff_flat, s_tiled, d_col, noise_flat, abias, nw)

    # Strip the junk columns introduced by the polyphase flattening / lane padding.
    out = out_flat[:, :, :H_out * Wh].reshape(B, Cout, H_out, Wh)[:, :, :, :W_out]
    return out


# ---------------------------------------------------------------------------
# Pure-JAX reference mirroring the PyTorch module (blur -> grouped stride-2 conv
# -> noise -> fused leaky relu), all in f32.
# ---------------------------------------------------------------------------
def _reference(x, style, conv_weight, mod_weight, mod_bias, noise, noise_weight, act_bias,
               *, blur_kernel=(1, 3, 3, 1), eps=1e-8, neg_slope=0.2, act_gain=math.sqrt(2.0)):
    B, Cin, H, W = x.shape
    _, Cout, _, K, _ = conv_weight.shape
    S = mod_weight.shape[1]

    s = style @ (mod_weight * (1.0 / math.sqrt(S))).T + mod_bias[None, :]    # EqualLinear

    scale = 1.0 / math.sqrt(Cin * K * K)
    w = scale * conv_weight * s.reshape(B, 1, Cin, 1, 1)
    demod = jax.lax.rsqrt(jnp.sum(w * w, axis=(2, 3, 4)) + eps)
    w = w * demod.reshape(B, Cout, 1, 1, 1)
    w = w.reshape(B * Cout, Cin, K, K)

    k1 = jnp.asarray(blur_kernel, jnp.float32)
    b2d = k1[None, :] * k1[:, None]
    b2d = b2d / jnp.sum(b2d)
    L = b2d.shape[0]
    p = L - 2 + (K - 1)
    p0, p1 = (p + 1) // 2, p // 2
    xpad = jnp.pad(x, ((0, 0), (0, 0), (p0, p1), (p0, p1)))
    wblur = jnp.tile(jnp.flip(b2d, (0, 1))[None, None], (Cin, 1, 1, 1))
    xb = jax.lax.conv_general_dilated(
        xpad, wblur, (1, 1), [(0, 0), (0, 0)],
        dimension_numbers=("NCHW", "OIHW", "NCHW"), feature_group_count=Cin)

    xb = xb.reshape(1, B * Cin, xb.shape[2], xb.shape[3])
    out = jax.lax.conv_general_dilated(
        xb, w, (2, 2), [(0, 0), (0, 0)],
        dimension_numbers=("NCHW", "OIHW", "NCHW"), feature_group_count=B)
    out = out.reshape(B, Cout, out.shape[2], out.shape[3])

    out = out + noise_weight * noise
    out = out + act_bias.reshape(1, Cout, 1, 1)
    out = jnp.where(out >= 0, out, out * neg_slope) * act_gain
    return out


if __name__ == "__main__":
    B, Cin, Cout, H, W, K, S = 2, 4, 8, 16, 16, 3, 32

    key = jax.random.PRNGKey(0)
    ks = jax.random.split(key, 6)
    x = jax.random.normal(ks[0], (B, Cin, H, W), jnp.float32)
    style = jax.random.normal(ks[1], (B, S), jnp.float32)
    conv_weight = jax.random.normal(ks[2], (1, Cout, Cin, K, K), jnp.float32)
    mod_weight = jax.random.normal(ks[3], (Cin, S), jnp.float32)
    mod_bias = jnp.ones((Cin,), jnp.float32)                 # bias_init = 1 as in the module
    noise = jax.random.normal(ks[4], (B, 1, H // 2, W // 2), jnp.float32)
    noise_weight = jnp.float32(0.3)                          # NoiseInjection weight (param)
    act_bias = 0.1 * jax.random.normal(ks[5], (Cout,), jnp.float32)

    out = jax.jit(styled_conv_down)(x, style, conv_weight, mod_weight, mod_bias,
                                    noise, noise_weight, act_bias)
    out = jax.block_until_ready(out)

    ref = jax.block_until_ready(
        _reference(x, style, conv_weight, mod_weight, mod_bias, noise, noise_weight, act_bias))

    assert out.shape == (B, Cout, H // 2, W // 2), out.shape
    max_err = float(jnp.max(jnp.abs(out - ref)))
    # bf16 matmul operands (f32 accumulation) -> small quantization error vs f32 reference.
    assert jnp.allclose(out, ref, rtol=5e-2, atol=5e-2), f"mismatch vs reference (max_abs_err={max_err})"

    print("KERNEL_OK")
</pallas_src>

<mosaic_0001>
module attributes {stable_mosaic.version = 11 : i64} {
  func.func @_styled_conv_down_kernel(%arg0: i32, %arg1: i32, %arg2: memref<1x4x4x150xbf16, #tpu.memory_space<vmem>>, %arg3: memref<8x144xbf16, #tpu.memory_space<vmem>>, %arg4: memref<1x1x144xf32, #tpu.memory_space<vmem>>, %arg5: memref<1x8x1xf32, #tpu.memory_space<vmem>>, %arg6: memref<1x1x128xf32, #tpu.memory_space<vmem>>, %arg7: memref<8x1xf32, #tpu.memory_space<vmem>>, %arg8: memref<1x1xf32, #tpu.memory_space<smem>>, %arg9: memref<1x8x128xf32, #tpu.memory_space<vmem>>) attributes {dimension_semantics = [#tpu.dimension_semantics<parallel>, #tpu.dimension_semantics<parallel>], iteration_bounds = array<i64: 1, 2>, scalar_prefetch = 0 : i64, scratch_operands = 0 : i64, tpu.core_type = #tpu.core_type<tc>, window_params = [{transform_indices = @transform_0, window_bounds = array<i64: 1, 4, 4, 150>}, {transform_indices = @transform_1, window_bounds = array<i64: 8, 144>}, {transform_indices = @transform_2, window_bounds = array<i64: 1, 1, 144>}, {transform_indices = @transform_3, window_bounds = array<i64: 1, 8, 1>}, {transform_indices = @transform_4, window_bounds = array<i64: 1, 1, 128>}, {transform_indices = @transform_5, window_bounds = array<i64: 8, 1>}, {transform_indices = @transform_6, window_bounds = array<i64: 1, 1>}, {transform_indices = @transform_7, window_bounds = array<i64: 1, 8, 128>}]} {
    %c0 = arith.constant 0 : index
    %c0_0 = arith.constant 0 : index
    %c0_1 = arith.constant 0 : index
    %0 = vector.load %arg5[%c0, %c0_0, %c0_1] : memref<1x8x1xf32, #tpu.memory_space<vmem>>, vector<1x8x1xf32>
    %1 = vector.shape_cast %0 : vector<1x8x1xf32> to vector<8x1xf32>
    %c0_2 = arith.constant 0 : index
    %c0_3 = arith.constant 0 : index
    %2 = vector.load %arg3[%c0_2, %c0_3] : memref<8x144xbf16, #tpu.memory_space<vmem>>, vector<8x144xbf16>
    %3 = arith.extf %2 : vector<8x144xbf16> to vector<8x144xf32>
    %c0_4 = arith.constant 0 : index
    %c0_5 = arith.constant 0 : index
    %c0_6 = arith.constant 0 : index
    %4 = vector.load %arg4[%c0_4, %c0_5, %c0_6] : memref<1x1x144xf32, #tpu.memory_space<vmem>>, vector<1x1x144xf32>
    %5 = vector.shape_cast %4 : vector<1x1x144xf32> to vector<1x144xf32>
    %6 = vector.broadcast %5 : vector<1x144xf32> to vector<8x144xf32>
    %7 = arith.mulf %3, %6 : vector<8x144xf32>
    %8 = vector.broadcast %1 : vector<8x1xf32> to vector<8x144xf32>
    %9 = arith.mulf %7, %8 : vector<8x144xf32>
    %10 = arith.truncf %9 : vector<8x144xf32> to vector<8x144xbf16>
    %c0_7 = arith.constant 0 : index
    %c0_8 = arith.constant 0 : index
    %c0_9 = arith.constant 0 : index
    %c0_10 = arith.constant 0 : index
    %11 = vector.load %arg2[%c0_7, %c0_8, %c0_9, %c0_10] : memref<1x4x4x150xbf16, #tpu.memory_space<vmem>>, vector<1x1x4x128xbf16>
    %12 = vector.shape_cast %11 : vector<1x1x4x128xbf16> to vector<4x128xbf16>
    %c0_11 = arith.constant 0 : index
    %c1 = arith.constant 1 : index
    %c0_12 = arith.constant 0 : index
    %c0_13 = arith.constant 0 : index
    %13 = vector.load %arg2[%c0_11, %c1, %c0_12, %c0_13] : memref<1x4x4x150xbf16, #tpu.memory_space<vmem>>, vector<1x1x4x128xbf16>
    %14 = vector.shape_cast %13 : vector<1x1x4x128xbf16> to vector<4x128xbf16>
    %c0_14 = arith.constant 0 : index
    %c0_15 = arith.constant 0 : index
    %c0_16 = arith.constant 0 : index
    %c1_17 = arith.constant 1 : index
    %15 = vector.load %arg2[%c0_14, %c0_15, %c0_16, %c1_17] : memref<1x4x4x150xbf16, #tpu.memory_space<vmem>>, vector<1x1x4x128xbf16>
    %16 = vector.shape_cast %15 : vector<1x1x4x128xbf16> to vector<4x128xbf16>
    %c0_18 = arith.constant 0 : index
    %c1_19 = arith.constant 1 : index
    %c0_20 = arith.constant 0 : index
    %c1_21 = arith.constant 1 : index
    %17 = vector.load %arg2[%c0_18, %c1_19, %c0_20, %c1_21] : memref<1x4x4x150xbf16, #tpu.memory_space<vmem>>, vector<1x1x4x128xbf16>
    %18 = vector.shape_cast %17 : vector<1x1x4x128xbf16> to vector<4x128xbf16>
    %c0_22 = arith.constant 0 : index
    %c0_23 = arith.constant 0 : index
    %c0_24 = arith.constant 0 : index
    %c2 = arith.constant 2 : index
    %19 = vector.load %arg2[%c0_22, %c0_23, %c0_24, %c2] : memref<1x4x4x150xbf16, #tpu.memory_space<vmem>>, vector<1x1x4x128xbf16>
    %20 = vector.shape_cast %19 : vector<1x1x4x128xbf16> to vector<4x128xbf16>
    %c0_25 = arith.constant 0 : index
    %c1_26 = arith.constant 1 : index
    %c0_27 = arith.constant 0 : index
    %c2_28 = arith.constant 2 : index
    %21 = vector.load %arg2[%c0_25, %c1_26, %c0_27, %c2_28] : memref<1x4x4x150xbf16, #tpu.memory_space<vmem>>, vector<1x1x4x128xbf16>
    %22 = vector.shape_cast %21 : vector<1x1x4x128xbf16> to vector<4x128xbf16>
    %c0_29 = arith.constant 0 : index
    %c2_30 = arith.constant 2 : index
    %c0_31 = arith.constant 0 : index
    %c0_32 = arith.constant 0 : index
    %23 = vector.load %arg2[%c0_29, %c2_30, %c0_31, %c0_32] : memref<1x4x4x150xbf16, #tpu.memory_space<vmem>>, vector<1x1x4x128xbf16>
    %24 = vector.shape_cast %23 : vector<1x1x4x128xbf16> to vector<4x128xbf16>
    %c0_33 = arith.constant 0 : index
    %c3 = arith.constant 3 : index
    %c0_34 = arith.constant 0 : index
    %c0_35 = arith.constant 0 : index
    %25 = vector.load %arg2[%c0_33, %c3, %c0_34, %c0_35] : memref<1x4x4x150xbf16, #tpu.memory_space<vmem>>, vector<1x1x4x128xbf16>
    %26 = vector.shape_cast %25 : vector<1x1x4x128xbf16> to vector<4x128xbf16>
    %c0_36 = arith.constant 0 : index
    %c2_37 = arith.constant 2 : index
    %c0_38 = arith.constant 0 : index
    %c1_39 = arith.constant 1 : index
    %27 = vector.load %arg2[%c0_36, %c2_37, %c0_38, %c1_39] : memref<1x4x4x150xbf16, #tpu.memory_space<vmem>>, vector<1x1x4x128xbf16>
    %28 = vector.shape_cast %27 : vector<1x1x4x128xbf16> to vector<4x128xbf16>
    %c0_40 = arith.constant 0 : index
    %c3_41 = arith.constant 3 : index
    %c0_42 = arith.constant 0 : index
    %c1_43 = arith.constant 1 : index
    %29 = vector.load %arg2[%c0_40, %c3_41, %c0_42, %c1_43] : memref<1x4x4x150xbf16, #tpu.memory_space<vmem>>, vector<1x1x4x128xbf16>
    %30 = vector.shape_cast %29 : vector<1x1x4x128xbf16> to vector<4x128xbf16>
    %c0_44 = arith.constant 0 : index
    %c2_45 = arith.constant 2 : index
    %c0_46 = arith.constant 0 : index
    %c2_47 = arith.constant 2 : index
    %31 = vector.load %arg2[%c0_44, %c2_45, %c0_46, %c2_47] : memref<1x4x4x150xbf16, #tpu.memory_space<vmem>>, vector<1x1x4x128xbf16>
    %32 = vector.shape_cast %31 : vector<1x1x4x128xbf16> to vector<4x128xbf16>
    %c0_48 = arith.constant 0 : index
    %c3_49 = arith.constant 3 : index
    %c0_50 = arith.constant 0 : index
    %c2_51 = arith.constant 2 : index
    %33 = vector.load %arg2[%c0_48, %c3_49, %c0_50, %c2_51] : memref<1x4x4x150xbf16, #tpu.memory_space<vmem>>, vector<1x1x4x128xbf16>
    %34 = vector.shape_cast %33 : vector<1x1x4x128xbf16> to vector<4x128xbf16>
    %c0_52 = arith.constant 0 : index
    %c0_53 = arith.constant 0 : index
    %c0_54 = arith.constant 0 : index
    %c10 = arith.constant 10 : index
    %35 = vector.load %arg2[%c0_52, %c0_53, %c0_54, %c10] : memref<1x4x4x150xbf16, #tpu.memory_space<vmem>>, vector<1x1x4x128xbf16>
    %36 = vector.shape_cast %35 : vector<1x1x4x128xbf16> to vector<4x128xbf16>
    %c0_55 = arith.constant 0 : index
    %c1_56 = arith.constant 1 : index
    %c0_57 = arith.constant 0 : index
    %c10_58 = arith.constant 10 : index
    %37 = vector.load %arg2[%c0_55, %c1_56, %c0_57, %c10_58] : memref<1x4x4x150xbf16, #tpu.memory_space<vmem>>, vector<1x1x4x128xbf16>
    %38 = vector.shape_cast %37 : vector<1x1x4x128xbf16> to vector<4x128xbf16>
    %c0_59 = arith.constant 0 : index
    %c0_60 = arith.constant 0 : index
    %c0_61 = arith.constant 0 : index
    %c11 = arith.constant 11 : index
    %39 = vector.load %arg2[%c0_59, %c0_60, %c0_61, %c11] : memref<1x4x4x150xbf16, #tpu.memory_space<vmem>>, vector<1x1x4x128xbf16>
    %40 = vector.shape_cast %39 : vector<1x1x4x128xbf16> to vector<4x128xbf16>
    %c0_62 = arith.constant 0 : index
    %c1_63 = arith.constant 1 : index
    %c0_64 = arith.constant 0 : index
    %c11_65 = arith.constant 11 : index
    %41 = vector.load %arg2[%c0_62, %c1_63, %c0_64, %c11_65] : memref<1x4x4x150xbf16, #tpu.memory_space<vmem>>, vector<1x1x4x128xbf16>
    %42 = vector.shape_cast %41 : vector<1x1x4x128xbf16> to vector<4x128xbf16>
    %c0_66 = arith.constant 0 : index
    %c0_67 = arith.constant 0 : index
    %c0_68 = arith.constant 0 : index
    %c12 = arith.constant 12 : index
    %43 = vector.load %arg2[%c0_66, %c0_67, %c0_68, %c12] : memref<1x4x4x150xbf16, #tpu.memory_space<vmem>>, vector<1x1x4x128xbf16>
    %44 = vector.shape_cast %43 : vector<1x1x4x128xbf16> to vector<4x128xbf16>
    %c0_69 = arith.constant 0 : index
    %c1_70 = arith.constant 1 : index
    %c0_71 = arith.constant 0 : index
    %c12_72 = arith.constant 12 : index
    %45 = vector.load %arg2[%c0_69, %c1_70, %c0_71, %c12_72] : memref<1x4x4x150xbf16, #tpu.memory_space<vmem>>, vector<1x1x4x128xbf16>
    %46 = vector.shape_cast %45 : vector<1x1x4x128xbf16> to vector<4x128xbf16>
    %c0_73 = arith.constant 0 : index
    %c2_74 = arith.constant 2 : index
    %c0_75 = arith.constant 0 : index
    %c10_76 = arith.constant 10 : index
    %47 = vector.load %arg2[%c0_73, %c2_74, %c0_75, %c10_76] : memref<1x4x4x150xbf16, #tpu.memory_space<vmem>>, vector<1x1x4x128xbf16>
    %48 = vector.shape_cast %47 : vector<1x1x4x128xbf16> to vector<4x128xbf16>
    %c0_77 = arith.constant 0 : index
    %c3_78 = arith.constant 3 : index
    %c0_79 = arith.constant 0 : index
    %c10_80 = arith.constant 10 : index
    %49 = vector.load %arg2[%c0_77, %c3_78, %c0_79, %c10_80] : memref<1x4x4x150xbf16, #tpu.memory_space<vmem>>, vector<1x1x4x128xbf16>
    %50 = vector.shape_cast %49 : vector<1x1x4x128xbf16> to vector<4x128xbf16>
    %c0_81 = arith.constant 0 : index
    %c2_82 = arith.constant 2 : index
    %c0_83 = arith.constant 0 : index
    %c11_84 = arith.constant 11 : index
    %51 = vector.load %arg2[%c0_81, %c2_82, %c0_83, %c11_84] : memref<1x4x4x150xbf16, #tpu.memory_space<vmem>>, vector<1x1x4x128xbf16>
    %52 = vector.shape_cast %51 : vector<1x1x4x128xbf16> to vector<4x128xbf16>
    %c0_85 = arith.constant 0 : index
    %c3_86 = arith.constant 3 : index
    %c0_87 = arith.constant 0 : index
    %c11_88 = arith.constant 11 : index
    %53 = vector.load %arg2[%c0_85, %c3_86, %c0_87, %c11_88] : memref<1x4x4x150xbf16, #tpu.memory_space<vmem>>, vector<1x1x4x128xbf16>
    %54 = vector.shape_cast %53 : vector<1x1x4x128xbf16> to vector<4x128xbf16>
    %c0_89 = arith.constant 0 : index
    %c2_90 = arith.constant 2 : index
    %c0_91 = arith.constant 0 : index
    %c12_92 = arith.constant 12 : index
    %55 = vector.load %arg2[%c0_89, %c2_90, %c0_91, %c12_92] : memref<1x4x4x150xbf16, #tpu.memory_space<vmem>>, vector<1x1x4x128xbf16>
    %56 = vector.shape_cast %55 : vector<1x1x4x128xbf16> to vector<4x128xbf16>
    %c0_93 = arith.constant 0 : index
    %c3_94 = arith.constant 3 : index
    %c0_95 = arith.constant 0 : index
    %c12_96 = arith.constant 12 : index
    %57 = vector.load %arg2[%c0_93, %c3_94, %c0_95, %c12_96] : memref<1x4x4x150xbf16, #tpu.memory_space<vmem>>, vector<1x1x4x128xbf16>
    %58 = vector.shape_cast %57 : vector<1x1x4x128xbf16> to vector<4x128xbf16>
    %c0_97 = arith.constant 0 : index
    %c0_98 = arith.constant 0 : index
    %c0_99 = arith.constant 0 : index
    %c20 = arith.constant 20 : index
    %59 = vector.load %arg2[%c0_97, %c0_98, %c0_99, %c20] : memref<1x4x4x150xbf16, #tpu.memory_space<vmem>>, vector<1x1x4x128xbf16>
    %60 = vector.shape_cast %59 : vector<1x1x4x128xbf16> to vector<4x128xbf16>
    %c0_100 = arith.constant 0 : index
    %c1_101 = arith.constant 1 : index
    %c0_102 = arith.constant 0 : index
    %c20_103 = arith.constant 20 : index
    %61 = vector.load %arg2[%c0_100, %c1_101, %c0_102, %c20_103] : memref<1x4x4x150xbf16, #tpu.memory_space<vmem>>, vector<1x1x4x128xbf16>
    %62 = vector.shape_cast %61 : vector<1x1x4x128xbf16> to vector<4x128xbf16>
    %c0_104 = arith.constant 0 : index
    %c0_105 = arith.constant 0 : index
    %c0_106 = arith.constant 0 : index
    %c21 = arith.constant 21 : index
    %63 = vector.load %arg2[%c0_104, %c0_105, %c0_106, %c21] : memref<1x4x4x150xbf16, #tpu.memory_space<vmem>>, vector<1x1x4x128xbf16>
    %64 = vector.shape_cast %63 : vector<1x1x4x128xbf16> to vector<4x128xbf16>
    %c0_107 = arith.constant 0 : index
    %c1_108 = arith.constant 1 : index
    %c0_109 = arith.constant 0 : index
    %c21_110 = arith.constant 21 : index
    %65 = vector.load %arg2[%c0_107, %c1_108, %c0_109, %c21_110] : memref<1x4x4x150xbf16, #tpu.memory_space<vmem>>, vector<1x1x4x128xbf16>
    %66 = vector.shape_cast %65 : vector<1x1x4x128xbf16> to vector<4x128xbf16>
    %c0_111 = arith.constant 0 : index
    %c0_112 = arith.constant 0 : index
    %c0_113 = arith.constant 0 : index
    %c22 = arith.constant 22 : index
    %67 = vector.load %arg2[%c0_111, %c0_112, %c0_113, %c22] : memref<1x4x4x150xbf16, #tpu.memory_space<vmem>>, vector<1x1x4x128xbf16>
    %68 = vector.shape_cast %67 : vector<1x1x4x128xbf16> to vector<4x128xbf16>
    %c0_114 = arith.constant 0 : index
    %c1_115 = arith.constant 1 : index
    %c0_116 = arith.constant 0 : index
    %c22_117 = arith.constant 22 : index
    %69 = vector.load %arg2[%c0_114, %c1_115, %c0_116, %c22_117] : memref<1x4x4x150xbf16, #tpu.memory_space<vmem>>, vector<1x1x4x128xbf16>
    %70 = vector.shape_cast %69 : vector<1x1x4x128xbf16> to vector<4x128xbf16>
    %c0_118 = arith.constant 0 : index
    %c2_119 = arith.constant 2 : index
    %c0_120 = arith.constant 0 : index
    %c20_121 = arith.constant 20 : index
    %71 = vector.load %arg2[%c0_118, %c2_119, %c0_120, %c20_121] : memref<1x4x4x150xbf16, #tpu.memory_space<vmem>>, vector<1x1x4x128xbf16>
    %72 = vector.shape_cast %71 : vector<1x1x4x128xbf16> to vector<4x128xbf16>
    %c0_122 = arith.constant 0 : index
    %c3_123 = arith.constant 3 : index
    %c0_124 = arith.constant 0 : index
    %c20_125 = arith.constant 20 : index
    %73 = vector.load %arg2[%c0_122, %c3_123, %c0_124, %c20_125] : memref<1x4x4x150xbf16, #tpu.memory_space<vmem>>, vector<1x1x4x128xbf16>
    %74 = vector.shape_cast %73 : vector<1x1x4x128xbf16> to vector<4x128xbf16>
    %c0_126 = arith.constant 0 : index
    %c2_127 = arith.constant 2 : index
    %c0_128 = arith.constant 0 : index
    %c21_129 = arith.constant 21 : index
    %75 = vector.load %arg2[%c0_126, %c2_127, %c0_128, %c21_129] : memref<1x4x4x150xbf16, #tpu.memory_space<vmem>>, vector<1x1x4x128xbf16>
    %76 = vector.shape_cast %75 : vector<1x1x4x128xbf16> to vector<4x128xbf16>
    %c0_130 = arith.constant 0 : index
    %c3_131 = arith.constant 3 : index
    %c0_132 = arith.constant 0 : index
    %c21_133 = arith.constant 21 : index
    %77 = vector.load %arg2[%c0_130, %c3_131, %c0_132, %c21_133] : memref<1x4x4x150xbf16, #tpu.memory_space<vmem>>, vector<1x1x4x128xbf16>
    %78 = vector.shape_cast %77 : vector<1x1x4x128xbf16> to vector<4x128xbf16>
    %c0_134 = arith.constant 0 : index
    %c2_135 = arith.constant 2 : index
    %c0_136 = arith.constant 0 : index
    %c22_137 = arith.constant 22 : index
    %79 = vector.load %arg2[%c0_134, %c2_135, %c0_136, %c22_137] : memref<1x4x4x150xbf16, #tpu.memory_space<vmem>>, vector<1x1x4x128xbf16>
    %80 = vector.shape_cast %79 : vector<1x1x4x128xbf16> to vector<4x128xbf16>
    %c0_138 = arith.constant 0 : index
    %c3_139 = arith.constant 3 : index
    %c0_140 = arith.constant 0 : index
    %c22_141 = arith.constant 22 : index
    %81 = vector.load %arg2[%c0_138, %c3_139, %c0_140, %c22_141] : memref<1x4x4x150xbf16, #tpu.memory_space<vmem>>, vector<1x1x4x128xbf16>
    %82 = vector.shape_cast %81 : vector<1x1x4x128xbf16> to vector<4x128xbf16>
    %83 = tpu.concatenate %12, %14, %16, %18, %20, %22, %24, %26, %28, %30, %32, %34, %36, %38, %40, %42 in 0 : vector<4x128xbf16>, vector<4x128xbf16>, vector<4x128xbf16>, vector<4x128xbf16>, vector<4x128xbf16>, vector<4x128xbf16>, vector<4x128xbf16>, vector<4x128xbf16>, vector<4x128xbf16>, vector<4x128xbf16>, vector<4x128xbf16>, vector<4x128xbf16>, vector<4x128xbf16>, vector<4x128xbf16>, vector<4x128xbf16>, vector<4x128xbf16> -> vector<64x128xbf16>
    %84 = tpu.concatenate %44, %46, %48, %50, %52, %54, %56, %58, %60, %62, %64, %66, %68, %70, %72, %74 in 0 : vector<4x128xbf16>, vector<4x128xbf16>, vector<4x128xbf16>, vector<4x128xbf16>, vector<4x128xbf16>, vector<4x128xbf16>, vector<4x128xbf16>, vector<4x128xbf16>, vector<4x128xbf16>, vector<4x128xbf16>, vector<4x128xbf16>, vector<4x128xbf16>, vector<4x128xbf16>, vector<4x128xbf16>, vector<4x128xbf16>, vector<4x128xbf16> -> vector<64x128xbf16>
    %85 = tpu.concatenate %76, %78, %80, %82 in 0 : vector<4x128xbf16>, vector<4x128xbf16>, vector<4x128xbf16>, vector<4x128xbf16> -> vector<16x128xbf16>
    %86 = tpu.concatenate %83, %84, %85 in 0 : vector<64x128xbf16>, vector<64x128xbf16>, vector<16x128xbf16> -> vector<144x128xbf16>
    %cst = arith.constant dense<0.000000e+00> : vector<8x128xf32>
    %87 = tpu.matmul %10, %86, %cst {dimension_numbers = #tpu.dot_dimension_numbers<[1], [0], [0], [1], [0, 0, 1, 1], [], []>} : vector<8x144xbf16>, vector<144x128xbf16>, vector<8x128xf32> -> vector<8x128xf32>
    %c0_142 = arith.constant 0 : index
    %c0_143 = arith.constant 0 : index
    %88 = memref.load %arg8[%c0_142, %c0_143] : memref<1x1xf32, #tpu.memory_space<smem>>
    %c0_144 = arith.constant 0 : index
    %c0_145 = arith.constant 0 : index
    %c0_146 = arith.constant 0 : index
    %89 = vector.load %arg6[%c0_144, %c0_145, %c0_146] : memref<1x1x128xf32, #tpu.memory_space<vmem>>, vector<1x1x128xf32>
    %90 = vector.shape_cast %89 : vector<1x1x128xf32> to vector<1x128xf32>
    %91 = vector.broadcast %88 : f32 to vector<1x128xf32>
    %92 = arith.mulf %91, %90 : vector<1x128xf32>
    %93 = vector.broadcast %92 : vector<1x128xf32> to vector<8x128xf32>
    %94 = arith.addf %87, %93 : vector<8x128xf32>
    %c0_147 = arith.constant 0 : index
    %c0_148 = arith.constant 0 : index
    %95 = vector.load %arg7[%c0_147, %c0_148] : memref<8x1xf32, #tpu.memory_space<vmem>>, vector<8x1xf32>
    %96 = vector.broadcast %95 : vector<8x1xf32> to vector<8x128xf32>
    %97 = arith.addf %94, %96 : vector<8x128xf32>
    %cst_149 = arith.constant 0.000000e+00 : f32
    %98 = vector.broadcast %cst_149 : f32 to vector<8x128xf32>
    %99 = arith.cmpf oge, %97, %98 : vector<8x128xf32>
    %cst_150 = arith.constant 2.000000e-01 : f32
    %100 = vector.broadcast %cst_150 : f32 to vector<8x128xf32>
    %101 = arith.mulf %97, %100 : vector<8x128xf32>
    %102 = arith.select %99, %97, %101 : vector<8x128xi1>, vector<8x128xf32>
    %cst_151 = arith.constant 1.41421354 : f32
    %103 = vector.broadcast %cst_151 : f32 to vector<8x128xf32>
    %104 = arith.mulf %102, %103 : vector<8x128xf32>
    %c0_152 = arith.constant 0 : index
    %c0_153 = arith.constant 0 : index
    %c0_154 = arith.constant 0 : index
    %105 = vector.load %arg9[%c0_152, %c0_153, %c0_154] : memref<1x8x128xf32, #tpu.memory_space<vmem>>, vector<1x8x128xf32>
    %106 = vector.shape_cast %105 : vector<1x8x128xf32> to vector<8x128xf32>
    %107 = vector.shape_cast %104 : vector<8x128xf32> to vector<1x8x128xf32>
    tpu.vector_store %arg9[%c0_152, %c0_153, %c0_154], %107 {strides = array<i32>} : memref<1x8x128xf32, #tpu.memory_space<vmem>>, vector<1x8x128xf32>,
    return
  }
  func.func @transform_0(%arg0: i32, %arg1: i32) -> (i32, i32, i32, i32) {
    %c0_i32 = arith.constant 0 : i32
    %c0_i32_0 = arith.constant 0 : i32
    %c0_i32_1 = arith.constant 0 : i32
    %c0_i32_2 = arith.constant 0 : i32
    return %arg1, %c0_i32, %c0_i32_0, %c0_i32_1 : i32, i32, i32, i32
  }
  func.func @transform_1(%arg0: i32, %arg1: i32) -> (i32, i32) {
    %c0_i32 = arith.constant 0 : i32
    %c0_i32_0 = arith.constant 0 : i32
    return %arg0, %c0_i32 : i32, i32
  }
  func.func @transform_2(%arg0: i32, %arg1: i32) -> (i32, i32, i32) {
    %c0_i32 = arith.constant 0 : i32
    %c0_i32_0 = arith.constant 0 : i32
    %c0_i32_1 = arith.constant 0 : i32
    return %arg1, %c0_i32, %c0_i32_0 : i32, i32, i32
  }
  func.func @transform_3(%arg0: i32, %arg1: i32) -> (i32, i32, i32) {
    %c0_i32 = arith.constant 0 : i32
    %c0_i32_0 = arith.constant 0 : i32
    return %arg1, %arg0, %c0_i32 : i32, i32, i32
  }
  func.func @transform_4(%arg0: i32, %arg1: i32) -> (i32, i32, i32) {
    %c0_i32 = arith.constant 0 : i32
    %c0_i32_0 = arith.constant 0 : i32
    %c0_i32_1 = arith.constant 0 : i32
    return %arg1, %c0_i32, %c0_i32_0 : i32, i32, i32
  }
  func.func @transform_5(%arg0: i32, %arg1: i32) -> (i32, i32) {
    %c0_i32 = arith.constant 0 : i32
    %c0_i32_0 = arith.constant 0 : i32
    return %arg0, %c0_i32 : i32, i32
  }
  func.func @transform_6(%arg0: i32, %arg1: i32) -> (i32, i32) {
    %c0_i32 = arith.constant 0 : i32
    %c0_i32_0 = arith.constant 0 : i32
    %c0_i32_1 = arith.constant 0 : i32
    return %c0_i32, %c0_i32_0 : i32, i32
  }
  func.func @transform_7(%arg0: i32, %arg1: i32) -> (i32, i32, i32) {
    %c0_i32 = arith.constant 0 : i32
    %c0_i32_0 = arith.constant 0 : i32
    return %arg1, %arg0, %c0_i32 : i32, i32, i32
  }
}

</mosaic_0001>

<llo_original>
// kernel: reverse
$region0: #{reverse}
  %s0 = inlined_call_operand.vmem [shape: f32[4,4], index: 0, kind: input, shape index: {}]
  %s1 = inlined_call_operand.vmem [shape: f32[4,4], index: 1, kind: output, shape index: {}]
  %v2 = vlaneseq
  %v3 = vsub.s32 3, %v2
  %4 = vset.pattern.permute.xlu0 %v3
  $region1: #{reverse} parent=0
    #allocation0 [shape = 'u8[8192]{0}', space=vmem, size = 0x2000, scoped, tag = 'operand span for operand 0']
    #allocation1 [shape = 'u8[4096]{0}', space=vmem, size = 0x1000, scoped, tag = 'packed  for operand 0']
    #allocation2 [shape = 'u8[4096]{0}', space=vmem, size = 0x1000, scoped, tag = 'operand span for operand 1']
    #allocation3 [shape = 'u8[2048]{0}', space=vmem, size = 0x800, scoped, tag = 'packed  for operand 1']
    %s5 = scalar_lea.vmem [#allocation1], 4
    // Predicated region
    $region2: #{reverse} parent=1 // pred_check
      _
    $region3: #{reverse} parent=1 // pred_check_branch
      %7 = sbr.rel (0) target = $region5
    $region4: #{reverse} parent=1 // pred_region
      // Predicated region
      $region6: #{reverse} parent=4 // pred_check
        _
      $region7: #{reverse} parent=4 // pred_check_branch
        %9 = sbr.rel target = $region9
      $region8: #{reverse} parent=4 // pred_region
        // Predicated region
        $region21: #{reverse} parent=8 // pred_check
          _
        $region22: #{reverse} parent=8 // pred_check_branch
          %25 = sbr.rel (0) target = $region24
        $region23: #{reverse} parent=8 // pred_region
          %s27 = ssub.s32 16, 1
          loop: start=0, step=1, limit=1
          $region25: #{reverse} parent=23 // loop_pre_header
            _
          $region26: #{reverse} parent=23 // loop_header
            %s29 = sphi 0, %s33
            %p30 = scmp.ge.s32.totalorder %s29, 1
            %s34 = sphi %s0, %s0
            %s35 = sphi %s5, %s5
          $region27: #{reverse} parent=23 // loop_header_branch
            %32 = sbr.rel (%p30) target = $region31
          $region28: #{reverse} parent=23 // loop_body
            %v36 = vld [vmem:[%s34] sm:%s27]
            %37 = vst [vmem:[%s35] sm:%s27] %v36
          $region29: #{reverse} parent=23 // loop_footer
            %s33 = sadd.s32 1, %s29
          $region30: #{reverse} parent=23 // loop_footer_branch
            %28 = sbr.rel target = $region26
          $region31: #{reverse} parent=23 // loop_exit
            _
        $region24: #{reverse} parent=8 // pred_fallthru
          _
      $region9: #{reverse} parent=4 // pred_fallthru
        _
      // Predicated region
      $region10: #{reverse} parent=4 // pred_check
        _
      $region11: #{reverse} parent=4 // pred_check_branch
        %11 = sbr.rel (0) target = $region13
      $region12: #{reverse} parent=4 // pred_region
        %s13 = ssub.s32 16, 1
        loop: start=0, step=1, limit=1
        $region14: #{reverse} parent=12 // loop_pre_header
          _
        $region15: #{reverse} parent=12 // loop_header
          %s15 = sphi 0, %s19
          %p16 = scmp.ge.s32.totalorder %s15, 1
          %s20 = sphi %s0, %s0
          %s21 = sphi %s5, %s5
        $region16: #{reverse} parent=12 // loop_header_branch
          %18 = sbr.rel (%p16) target = $region20
        $region17: #{reverse} parent=12 // loop_body
          %v22 = vld [vmem:[%s20] sm:%s13]
          %23 = vst [vmem:[%s21] sm:%s13] %v22
        $region18: #{reverse} parent=12 // loop_footer
          %s19 = sadd.s32 1, %s15
        $region19: #{reverse} parent=12 // loop_footer_branch
          %14 = sbr.rel target = $region15
        $region20: #{reverse} parent=12 // loop_exit
          _
      $region13: #{reverse} parent=4 // pred_fallthru
        _
    $region5: #{reverse} parent=1 // pred_fallthru
      _
    %38 = vnop
    %s40 = sshll.u32 1, 4
    %s41 = ssub.s32 %s40, 1
    %s42 = scalar_lea.vmem [#allocation1], 4
    %v43 = vld [vmem:[%s42] sm:%s41]
    %s44 = scalar_lea.vmem [#allocation0], 8
    %45 = vst [vmem:[%s44] sm:%s41] %v43
    %v46 = vld [vmem:[#allocation1] sm:%s41]
    %47 = vst [vmem:[#allocation0] sm:%s41] %v46
    %s48 = scalar_lea.vmem [#allocation0], 7
    %v49 = vld [vmem:[%s48] ss:$-1 sm:$0xff]
    %v50 = vrot.slane %v49, 4
    %51 = vperm.xlu0 %4, %v50
    %v52 = vpop.permute.xlu0 %51
    %53 = vst [vmem:[#allocation2] sm:$0xff] %v52
    %s54 = scalar_lea.vmem [#allocation0], 8
    %s55 = scalar_lea.vmem %s54, 7 [#allocation0]
    %v56 = vld [vmem:[%s55] ss:$-1 sm:$0xff]
    %v57 = vrot.slane %v56, 4
    %58 = vperm.xlu0 %4, %v57
    %v59 = vpop.permute.xlu0 %58
    %v60 = vlaneseq
    %v61 = vshrl.u32 %v60, 7
    %vm62 = vcmp.lt.s32.totalorder %v61, 4
    %63 = vst.msk [vmem:[#allocation2] sm:$0xff] %vm62, %v59
    %s65 = sshll.u32 1, 4
    %s66 = ssub.s32 %s65, 1
    %v68 = vld [vmem:[#allocation2] sm:%s66]
    %s69 = sshll.u32 1, 4
    %s70 = ssub.s32 %s69, 1
    %71 = vst [vmem:[#allocation3] sm:%s70] %v68
    // Predicated region
    $region32: #{reverse} parent=1 // pred_check
      _
    $region33: #{reverse} parent=1 // pred_check_branch
      %73 = sbr.rel (0) target = $region35
    $region34: #{reverse} parent=1 // pred_region
      // Predicated region
      $region36: #{reverse} parent=34 // pred_check
        _
      $region37: #{reverse} parent=34 // pred_check_branch
        %75 = sbr.rel target = $region39
      $region38: #{reverse} parent=34 // pred_region
        // Predicated region
        $region51: #{reverse} parent=38 // pred_check
          _
        $region52: #{reverse} parent=38 // pred_check_branch
          %91 = sbr.rel (0) target = $region54
        $region53: #{reverse} parent=38 // pred_region
          %s93 = ssub.s32 16, 1
          loop: start=0, step=1, limit=1
          $region55: #{reverse} parent=53 // loop_pre_header
            _
          $region56: #{reverse} parent=53 // loop_header
            %s95 = sphi 0, %s99
            %p96 = scmp.ge.s32.totalorder %s95, 1
            %s100 = sphi [#allocation3], [#allocation3]
            %s101 = sphi %s1, %s1
          $region57: #{reverse} parent=53 // loop_header_branch
            %98 = sbr.rel (%p96) target = $region61
          $region58: #{reverse} parent=53 // loop_body
            %v102 = vld [vmem:[%s100] sm:%s93]
            %103 = vst [vmem:[%s101] sm:%s93] %v102
          $region59: #{reverse} parent=53 // loop_footer
            %s99 = sadd.s32 1, %s95
          $region60: #{reverse} parent=53 // loop_footer_branch
            %94 = sbr.rel target = $region56
          $region61: #{reverse} parent=53 // loop_exit
            _
        $region54: #{reverse} parent=38 // pred_fallthru
          _
      $region39: #{reverse} parent=34 // pred_fallthru
        _
      // Predicated region
      $region40: #{reverse} parent=34 // pred_check
        _
      $region41: #{reverse} parent=34 // pred_check_branch
        %77 = sbr.rel (0) target = $region43
      $region42: #{reverse} parent=34 // pred_region
        %s79 = ssub.s32 16, 1
        loop: start=0, step=1, limit=1
        $region44: #{reverse} parent=42 // loop_pre_header
          _
        $region45: #{reverse} parent=42 // loop_header
          %s81 = sphi 0, %s85
          %p82 = scmp.ge.s32.totalorder %s81, 1
          %s86 = sphi [#allocation3], [#allocation3]
          %s87 = sphi %s1, %s1
        $region46: #{reverse} parent=42 // loop_header_branch
          %84 = sbr.rel (%p82) target = $region50
        $region47: #{reverse} parent=42 // loop_body
          %v88 = vld [vmem:[%s86] sm:%s79]
          %89 = vst [vmem:[%s87] sm:%s79] %v88
        $region48: #{reverse} parent=42 // loop_footer
          %s85 = sadd.s32 1, %s81
        $region49: #{reverse} parent=42 // loop_footer_branch
          %80 = sbr.rel target = $region45
        $region50: #{reverse} parent=42 // loop_exit
          _
      $region43: #{reverse} parent=34 // pred_fallthru
        _
    $region35: #{reverse} parent=1 // pred_fallthru
      _
    %104 = vnop

// kernel: styled_conv_down.1
$region0: #{styled_conv_down.1}
  #allocation0 [shape = 'u32[]', space=smem, size = 0x4, offset = 0x4, fixed_abs, tag = 'smem constant byte address 0x4 - core index']
  #allocation1 [shape = 'u32[144,128]{1,0:T(1,128)}', space=vmem, size = 0x12000, scoped, tag = 'internal scratch']
  #allocation2 [shape = 'f32[1,1]{1,0:T(1,128)S(6)}', space=smem, size = 0x200, scoped, tag = 'scoped memory for styled_conv_down.1']
  %s0 = inlined_call_operand.vmem [shape: bf16[2,4,4,150], index: 0, kind: input, shape index: {}]
  %s1 = inlined_call_operand.vmem [shape: bf16[8,144], index: 1, kind: input, shape index: {}]
  %s2 = inlined_call_operand.vmem [shape: f32[2,1,144], index: 2, kind: input, shape index: {}]
  %s3 = inlined_call_operand.vmem [shape: f32[2,8,1], index: 3, kind: input, shape index: {}]
  %s4 = inlined_call_operand.vmem [shape: f32[2,1,128], index: 4, kind: input, shape index: {}]
  %s5 = inlined_call_operand.vmem [shape: f32[8,1], index: 5, kind: input, shape index: {}]
  %s6 = inlined_call_operand.<no memory space> [shape: f32[1,1], index: 6, kind: input, shape index: {}]
  %s7 = inlined_call_operand.vmem [shape: f32[2,8,128], index: 7, kind: output, shape index: {}]
  %s8 = sld [smem:[#allocation0]]
  $region61: #{styled_conv_down.1} parent=0
    _
  %s10 = ssub.s32 1, %s8
  %s11 = scalar_select 0, %s10, %s8
  %12 = sst [smem:[#allocation2]] %s6
  loop: start=0, step=1, limit=4
  $region2: #{styled_conv_down.1} parent=0 // loop_pre_header
    _
  $region3: #{styled_conv_down.1} parent=0 // loop_header
    %s14 = sphi 0, %s18
    %p15 = scmp.ge.s32.totalorder %s14, 4
    %s21 = sphi 0, %s33
    %s22 = sphi 0, %s29
    %s23 = sphi 0, %s21
    %s24 = sphi 0, %s22
    %s25 = sphi 0, %s23
    %s26 = sphi 0, %s24
    %s36 = sphi 0, %s38
    %s39 = sphi 0, %s36
    %s40 = sphi 0, %s39
    %s56 = sphi 0, %s40
    %s62 = sphi 0, %s64
    %s65 = sphi 0, %s62
    %s66 = sphi 0, %s65
    %s82 = sphi 0, %s66
    %s88 = sphi 0, %s90
    %s91 = sphi 0, %s88
    %s92 = sphi 0, %s91
    %s108 = sphi 0, %s92
    %s116 = sphi 0, %s118
    %s119 = sphi 0, %s116
    %s120 = sphi 0, %s119
    %s136 = sphi 0, %s120
    %s142 = sphi 0, %s144
    %s145 = sphi 0, %s142
    %s146 = sphi 0, %s145
    %s162 = sphi 0, %s146
    %s168 = sphi 0, %s170
    %s171 = sphi 0, %s168
    %s172 = sphi 0, %s171
    %s188 = sphi 0, %s172
    %s192 = sphi 0, %s192
    %s194 = sphi 0, %s192
    %s195 = sphi 0, %s194
    %s209 = sphi 0, %s195
    %s217 = sphi 0, %s219
    %s220 = sphi 0, %s217
    %s221 = sphi 0, %s220
    %s237 = sphi 0, %s221
  $region4: #{styled_conv_down.1} parent=0 // loop_header_branch
    %17 = sbr.rel (%p15) target = $region8
  $region5: #{styled_conv_down.1} parent=0 // loop_body
    %s19 = ssub.s32 %s14, 1
    %s20 = ssub.s32 %s14, 2
    %s27 = sadd.s32 1, %s22
    %p28 = scmp.ge.s32.totalorder %s27, 2
    %s29 = scalar_select %p28, 0, %s27
    %s30 = sadd.s32 1, %s21
    %s31 = scalar_select %p28, %s30, %s21
    %p32 = scmp.ge.s32.totalorder %s31, 1
    %s33 = scalar_select %p32, 0, %s31
    %s34 = ssub.s32 %s22, %s29
    %p35 = scmp.eq.s32.totalorder %s34, 0
    %s37 = sadd.s32 %s36, 1
    %s38 = scalar_select %p35, %s36, %s37
    %p41 = pneg %p35
    %p42 = scmp.eq.s32.totalorder %s14, 1
    %p43 = por %p41, %p42
    %p44 = scmp.ne.s32.totalorder %s36, %s39
    %p45 = scmp.eq.s32.totalorder %s14, 0
    %p46 = por %p44, %p45
    %p47 = scmp.ne.s32.totalorder %s36, %s39
    %p48 = scmp.eq.s32.totalorder %s19, 1
    %p49 = por %p47, %p48
    %p50 = scmp.ne.s32.totalorder %s39, %s40
    %p51 = scmp.eq.s32.totalorder %s19, 0
    %p52 = por %p50, %p51
    %p53 = scmp.ne.s32.totalorder %s39, %s40
    %p54 = scmp.eq.s32.totalorder %s20, 1
    %p55 = por %p53, %p54
    %p57 = scmp.ne.s32.totalorder %s40, %s56
    %p58 = scmp.eq.s32.totalorder %s20, 0
    %p59 = por %p57, %p58
    %s60 = ssub.s32 %s21, %s33
    %p61 = scmp.eq.s32.totalorder %s60, 0
    %s63 = sadd.s32 %s62, 1
    %s64 = scalar_select %p61, %s62, %s63
    %p67 = pneg %p61
    %p68 = scmp.eq.s32.totalorder %s14, 1
    %p69 = por %p67, %p68
    %p70 = scmp.ne.s32.totalorder %s62, %s65
    %p71 = scmp.eq.s32.totalorder %s14, 0
    %p72 = por %p70, %p71
    %p73 = scmp.ne.s32.totalorder %s62, %s65
    %p74 = scmp.eq.s32.totalorder %s19, 1
    %p75 = por %p73, %p74
    %p76 = scmp.ne.s32.totalorder %s65, %s66
    %p77 = scmp.eq.s32.totalorder %s19, 0
    %p78 = por %p76, %p77
    %p79 = scmp.ne.s32.totalorder %s65, %s66
    %p80 = scmp.eq.s32.totalorder %s20, 1
    %p81 = por %p79, %p80
    %p83 = scmp.ne.s32.totalorder %s66, %s82
    %p84 = scmp.eq.s32.totalorder %s20, 0
    %p85 = por %p83, %p84
    %s86 = ssub.s32 %s22, %s29
    %p87 = scmp.eq.s32.totalorder %s86, 0
    %s89 = sadd.s32 %s88, 1
    %s90 = scalar_select %p87, %s88, %s89
    %p93 = pneg %p87
    %p94 = scmp.eq.s32.totalorder %s14, 1
    %p95 = por %p93, %p94
    %p96 = scmp.ne.s32.totalorder %s88, %s91
    %p97 = scmp.eq.s32.totalorder %s14, 0
    %p98 = por %p96, %p97
    %p99 = scmp.ne.s32.totalorder %s88, %s91
    %p100 = scmp.eq.s32.totalorder %s19, 1
    %p101 = por %p99, %p100
    %p102 = scmp.ne.s32.totalorder %s91, %s92
    %p103 = scmp.eq.s32.totalorder %s19, 0
    %p104 = por %p102, %p103
    %p105 = scmp.ne.s32.totalorder %s91, %s92
    %p106 = scmp.eq.s32.totalorder %s20, 1
    %p107 = por %p105, %p106
    %p109 = scmp.ne.s32.totalorder %s92, %s108
    %p110 = scmp.eq.s32.totalorder %s20, 0
    %p111 = por %p109, %p110
    %s112 = ssub.s32 %s22, %s29
    %s113 = ssub.s32 %s21, %s33
    %s114 = sor.u32 %s112, %s113
    %p115 = scmp.eq.s32.totalorder %s114, 0
    %s117 = sadd.s32 %s116, 1
    %s118 = scalar_select %p115, %s116, %s117
    %p121 = pneg %p115
    %p122 = scmp.eq.s32.totalorder %s14, 1
    %p123 = por %p121, %p122
    %p124 = scmp.ne.s32.totalorder %s116, %s119
    %p125 = scmp.eq.s32.totalorder %s14, 0
    %p126 = por %p124, %p125
    %p127 = scmp.ne.s32.totalorder %s116, %s119
    %p128 = scmp.eq.s32.totalorder %s19, 1
    %p129 = por %p127, %p128
    %p130 = scmp.ne.s32.totalorder %s119, %s120
    %p131 = scmp.eq.s32.totalorder %s19, 0
    %p132 = por %p130, %p131
    %p133 = scmp.ne.s32.totalorder %s119, %s120
    %p134 = scmp.eq.s32.totalorder %s20, 1
    %p135 = por %p133, %p134
    %p137 = scmp.ne.s32.totalorder %s120, %s136
    %p138 = scmp.eq.s32.totalorder %s20, 0
    %p139 = por %p137, %p138
    %s140 = ssub.s32 %s22, %s29
    %p141 = scmp.eq.s32.totalorder %s140, 0
    %s143 = sadd.s32 %s142, 1
    %s144 = scalar_select %p141, %s142, %s143
    %p147 = pneg %p141
    %p148 = scmp.eq.s32.totalorder %s14, 1
    %p149 = por %p147, %p148
    %p150 = scmp.ne.s32.totalorder %s142, %s145
    %p151 = scmp.eq.s32.totalorder %s14, 0
    %p152 = por %p150, %p151
    %p153 = scmp.ne.s32.totalorder %s142, %s145
    %p154 = scmp.eq.s32.totalorder %s19, 1
    %p155 = por %p153, %p154
    %p156 = scmp.ne.s32.totalorder %s145, %s146
    %p157 = scmp.eq.s32.totalorder %s19, 0
    %p158 = por %p156, %p157
    %p159 = scmp.ne.s32.totalorder %s145, %s146
    %p160 = scmp.eq.s32.totalorder %s20, 1
    %p161 = por %p159, %p160
    %p163 = scmp.ne.s32.totalorder %s146, %s162
    %p164 = scmp.eq.s32.totalorder %s20, 0
    %p165 = por %p163, %p164
    %s166 = ssub.s32 %s21, %s33
    %p167 = scmp.eq.s32.totalorder %s166, 0
    %s169 = sadd.s32 %s168, 1
    %s170 = scalar_select %p167, %s168, %s169
    %p173 = pneg %p167
    %p174 = scmp.eq.s32.totalorder %s14, 1
    %p175 = por %p173, %p174
    %p176 = scmp.ne.s32.totalorder %s168, %s171
    %p177 = scmp.eq.s32.totalorder %s14, 0
    %p178 = por %p176, %p177
    %p179 = scmp.ne.s32.totalorder %s168, %s171
    %p180 = scmp.eq.s32.totalorder %s19, 1
    %p181 = por %p179, %p180
    %p182 = scmp.ne.s32.totalorder %s171, %s172
    %p183 = scmp.eq.s32.totalorder %s19, 0
    %p184 = por %p182, %p183
    %p185 = scmp.ne.s32.totalorder %s171, %s172
    %p186 = scmp.eq.s32.totalorder %s20, 1
    %p187 = por %p185, %p186
    %p189 = scmp.ne.s32.totalorder %s172, %s188
    %p190 = scmp.eq.s32.totalorder %s20, 0
    %p191 = por %p189, %p190
    %s193 = sadd.s32 %s192, 1
    %p196 = scmp.eq.s32.totalorder %s14, 1
    %p197 = scmp.ne.s32.totalorder %s192, %s194
    %p198 = scmp.eq.s32.totalorder %s14, 0
    %p199 = por %p197, %p198
    %p200 = scmp.ne.s32.totalorder %s192, %s194
    %p201 = scmp.eq.s32.totalorder %s19, 1
    %p202 = por %p200, %p201
    %p203 = scmp.ne.s32.totalorder %s194, %s195
    %p204 = scmp.eq.s32.totalorder %s19, 0
    %p205 = por %p203, %p204
    %p206 = scmp.ne.s32.totalorder %s194, %s195
    %p207 = scmp.eq.s32.totalorder %s20, 1
    %p208 = por %p206, %p207
    %p210 = scmp.ne.s32.totalorder %s195, %s209
    %p211 = scmp.eq.s32.totalorder %s20, 0
    %p212 = por %p210, %p211
    %s213 = ssub.s32 %s22, %s29
    %s214 = ssub.s32 %s21, %s33
    %s215 = sor.u32 %s213, %s214
    %p216 = scmp.eq.s32.totalorder %s215, 0
    %s218 = sadd.s32 %s217, 1
    %s219 = scalar_select %p216, %s217, %s218
    %p222 = pneg %p216
    %p223 = scmp.eq.s32.totalorder %s14, 1
    %p224 = por %p222, %p223
    %p225 = scmp.ne.s32.totalorder %s217, %s220
    %p226 = scmp.eq.s32.totalorder %s14, 0
    %p227 = por %p225, %p226
    %p228 = scmp.ne.s32.totalorder %s217, %s220
    %p229 = scmp.eq.s32.totalorder %s19, 1
    %p230 = por %p228, %p229
    %p231 = scmp.ne.s32.totalorder %s220, %s221
    %p232 = scmp.eq.s32.totalorder %s19, 0
    %p233 = por %p231, %p232
    %p234 = scmp.ne.s32.totalorder %s220, %s221
    %p235 = scmp.eq.s32.totalorder %s20, 1
    %p236 = por %p234, %p235
    %p238 = scmp.ne.s32.totalorder %s221, %s237
    %p239 = scmp.eq.s32.totalorder %s20, 0
    %p240 = por %p238, %p239
    %p241 = scmp.le.s32.totalorder 1, %s14
    %p242 = scmp.lt.s32.totalorder %s14, 3
    %p243 = pnand %p241, %p242
    %p244 = pneg %p243
    // Predicated region
    $region9: #{styled_conv_down.1} parent=5 // pred_check
      _
    $region10: #{styled_conv_down.1} parent=5 // pred_check_branch
      %246 = sbr.rel (%p243) target = $region12
    $region11: #{styled_conv_down.1} parent=5 // pred_region
      %s247 = ssub.s32 %s14, 1
      // Predicated region
      $region13: #{styled_conv_down.1} parent=11 // pred_check
        %p248 = pneg %p78
      $region14: #{styled_conv_down.1} parent=11 // pred_check_branch
        %250 = sbr.rel (%p248) target = $region16
      $region15: #{styled_conv_down.1} parent=11 // pred_region
        %p251 = scmp.lt.s32.totalorder %s23, 0
        %s252 = scalar_select %p251, %s23, 0
        %s253 = smul.addr %s252, 2
        %s254 = smul.addr %s253, 4
        %s255 = scalar_lea.vmem %s1, %s254
      $region16: #{styled_conv_down.1} parent=11 // pred_fallthru
        _
      // Predicated region
      $region17: #{styled_conv_down.1} parent=11 // pred_check
        %p256 = pneg %p184
      $region18: #{styled_conv_down.1} parent=11 // pred_check_branch
        %258 = sbr.rel (%p256) target = $region20
      $region19: #{styled_conv_down.1} parent=11 // pred_region
        %p259 = scmp.lt.s32.totalorder %s23, 0
        %s260 = scalar_select %p259, %s23, 0
        %s261 = smul.addr %s260, 8
        %s262 = scalar_lea.vmem %s5, %s261
      $region20: #{styled_conv_down.1} parent=11 // pred_fallthru
        _
      // Predicated region
      $region21: #{styled_conv_down.1} parent=11 // pred_check
        %p263 = pneg %p205
      $region22: #{styled_conv_down.1} parent=11 // pred_check_branch
        %265 = sbr.rel (%p263) target = $region24
      $region23: #{styled_conv_down.1} parent=11 // pred_region
        _
      $region24: #{styled_conv_down.1} parent=11 // pred_fallthru
        _
    $region12: #{styled_conv_down.1} parent=5 // pred_fallthru
      _
    %p266 = scmp.lt.s32.totalorder %s14, 2
    // Predicated region
    $region25: #{styled_conv_down.1} parent=5 // pred_check
      %p267 = pneg %p266
    $region26: #{styled_conv_down.1} parent=5 // pred_check_branch
      %269 = sbr.rel (%p267) target = $region28
    $region27: #{styled_conv_down.1} parent=5 // pred_region
      // Predicated region
      $region29: #{styled_conv_down.1} parent=27 // pred_check
        %p270 = pneg %p46
      $region30: #{styled_conv_down.1} parent=27 // pred_check_branch
        %272 = sbr.rel (%p270) target = $region32
      $region31: #{styled_conv_down.1} parent=27 // pred_region
        %p273 = scmp.lt.s32.totalorder %s22, 1
        %s274 = scalar_select %p273, %s22, 1
        %s275 = smul.addr %s274, 8
        %s276 = smul.addr %s275, 2
        %s277 = scalar_lea.vmem %s0, %s276
      $region32: #{styled_conv_down.1} parent=27 // pred_fallthru
        _
      // Predicated region
      $region33: #{styled_conv_down.1} parent=27 // pred_check
        %p278 = pneg %p98
      $region34: #{styled_conv_down.1} parent=27 // pred_check_branch
        %280 = sbr.rel (%p278) target = $region36
      $region35: #{styled_conv_down.1} parent=27 // pred_region
        %p281 = scmp.lt.s32.totalorder %s22, 1
        %s282 = scalar_select %p281, %s22, 1
        %s283 = smul.addr %s282, 2
        %s284 = scalar_lea.vmem %s2, %s283
      $region36: #{styled_conv_down.1} parent=27 // pred_fallthru
        _
      // Predicated region
      $region37: #{styled_conv_down.1} parent=27 // pred_check
        %p285 = pneg %p126
      $region38: #{styled_conv_down.1} parent=27 // pred_check_branch
        %287 = sbr.rel (%p285) target = $region40
      $region39: #{styled_conv_down.1} parent=27 // pred_region
        %p288 = scmp.lt.s32.totalorder %s22, 1
        %s289 = scalar_select %p288, %s22, 1
        %p290 = scmp.lt.s32.totalorder %s21, 0
        %s291 = scalar_select %p290, %s21, 0
        %s292 = sadd.s32 %s291, %s289
        %s293 = smul.addr %s292, 8
        %s294 = scalar_lea.vmem %s3, %s293
      $region40: #{styled_conv_down.1} parent=27 // pred_fallthru
        _
      // Predicated region
      $region41: #{styled_conv_down.1} parent=27 // pred_check
        %p295 = pneg %p152
      $region42: #{styled_conv_down.1} parent=27 // pred_check_branch
        %297 = sbr.rel (%p295) target = $region44
      $region43: #{styled_conv_down.1} parent=27 // pred_region
        %p298 = scmp.lt.s32.totalorder %s22, 1
        %s299 = scalar_select %p298, %s22, 1
        %s300 = scalar_lea.vmem %s4, %s299
      $region44: #{styled_conv_down.1} parent=27 // pred_fallthru
        _
    $region28: #{styled_conv_down.1} parent=5 // pred_fallthru
      _
    %p301 = scmp.le.s32.totalorder 1, %s14
    %p302 = scmp.lt.s32.totalorder %s14, 3
    %p303 = pnand %p301, %p302
    %p304 = pneg %p303
    // Predicated region
    $region45: #{styled_conv_down.1} parent=5 // pred_check
      _
    $region46: #{styled_conv_down.1} parent=5 // pred_check_branch
      %306 = sbr.rel (%p303) target = $region48
    $region47: #{styled_conv_down.1} parent=5 // pred_region
      %s307 = ssub.s32 %s14, 1
      %p308 = scmp.lt.s32.totalorder %s24, 1
      %s309 = scalar_select %p308, %s24, 1
      %s310 = smul.addr %s309, 8
      %s311 = smul.addr %s310, 2
      %s312 = scalar_lea.vmem %s0, %s311
      %p313 = pneg %p52
      %p314 = pneg %p49
      %p315 = scmp.lt.s32.totalorder %s23, 0
      %s316 = scalar_select %p315, %s23, 0
      %s317 = smul.addr %s316, 2
      %s318 = smul.addr %s317, 4
      %s319 = scalar_lea.vmem %s1, %s318
      %p320 = pneg %p78
      %p321 = pneg %p75
      %p322 = scmp.lt.s32.totalorder %s24, 1
      %s323 = scalar_select %p322, %s24, 1
      %s324 = smul.addr %s323, 2
      %s325 = scalar_lea.vmem %s2, %s324
      %p326 = pneg %p104
      %p327 = pneg %p101
      %p328 = scmp.lt.s32.totalorder %s24, 1
      %s329 = scalar_select %p328, %s24, 1
      %p330 = scmp.lt.s32.totalorder %s23, 0
      %s331 = scalar_select %p330, %s23, 0
      %s332 = sadd.s32 %s331, %s329
      %s333 = smul.addr %s332, 8
      %s334 = scalar_lea.vmem %s3, %s333
      %p335 = pneg %p132
      %p336 = pneg %p129
      %p337 = scmp.lt.s32.totalorder %s24, 1
      %s338 = scalar_select %p337, %s24, 1
      %s339 = scalar_lea.vmem %s4, %s338
      %p340 = pneg %p158
      %p341 = pneg %p155
      %p342 = scmp.lt.s32.totalorder %s23, 0
      %s343 = scalar_select %p342, %s23, 0
      %s344 = smul.addr %s343, 8
      %s345 = scalar_lea.vmem %s5, %s344
      %p346 = pneg %p184
      %p347 = pneg %p181
      %p348 = pneg %p205
      %p349 = pneg %p202
      %p350 = pneg %p233
      %p351 = pneg %p230
      %p352 = scmp.lt.s32.totalorder %s24, 1
      %s353 = scalar_select %p352, %s24, 1
      %p354 = scmp.lt.s32.totalorder %s23, 0
      %s355 = scalar_select %p354, %s23, 0
      %s356 = sadd.s32 %s355, %s353
      %s357 = smul.addr %s356, 8
      %s358 = scalar_lea.vmem %s7, %s357
      %p359 = scmp.lt.s32.totalorder %s24, 1
      %s360 = scalar_select %p359, %s24, 1
      %s361 = smul.addr %s360, 8
      %s362 = smul.addr %s361, 2
      %s363 = scalar_lea.vmem %s0, %s362
      %p364 = scmp.lt.s32.totalorder %s23, 0
      %s365 = scalar_select %p364, %s23, 0
      %s366 = smul.addr %s365, 2
      %s367 = smul.addr %s366, 4
      %s368 = scalar_lea.vmem %s1, %s367
      %p369 = scmp.lt.s32.totalorder %s24, 1
      %s370 = scalar_select %p369, %s24, 1
      %s371 = smul.addr %s370, 2
      %s372 = scalar_lea.vmem %s2, %s371
      %p373 = scmp.lt.s32.totalorder %s24, 1
      %s374 = scalar_select %p373, %s24, 1
      %p375 = scmp.lt.s32.totalorder %s23, 0
      %s376 = scalar_select %p375, %s23, 0
      %s377 = sadd.s32 %s376, %s374
      %s378 = smul.addr %s377, 8
      %s379 = scalar_lea.vmem %s3, %s378
      %p380 = scmp.lt.s32.totalorder %s24, 1
      %s381 = scalar_select %p380, %s24, 1
      %s382 = scalar_lea.vmem %s4, %s381
      %p383 = scmp.lt.s32.totalorder %s23, 0
      %s384 = scalar_select %p383, %s23, 0
      %s385 = smul.addr %s384, 8
      %s386 = scalar_lea.vmem %s5, %s385
      %p387 = scmp.lt.s32.totalorder %s24, 1
      %s388 = scalar_select %p387, %s24, 1
      %p389 = scmp.lt.s32.totalorder %s23, 0
      %s390 = scalar_select %p389, %s23, 0
      %s391 = sadd.s32 %s390, %s388
      %s392 = smul.addr %s391, 8
      %s393 = scalar_lea.vmem %s7, %s392
      %v395 = vld [vmem:[%s379] sm:$0xff]
      %v396 = vld [vmem:[%s368] sm:$0xff]
      %v397 = vunpack.c.l.bf16 %v396
      %v398 = vunpack.c.h.bf16 %v396
      %v399 = vld [vmem:[%s372] sm:$0x3]
      %v401 = vlaneseq
      %v402 = vshrl.u32 %v401, 7
      %v403 = vsub.s32 0, %v402
      %v404 = vrot.slane %v399, %v403
      %v405 = vlaneseq
      %v406 = vshrl.u32 %v405, 7
      %v407 = vsub.s32 1, %v406
      %v408 = vrot.slane %v399, %v407
      %v411 = vmul.f32 %v397, %v404
      %v412 = vmul.f32 %v398, %v408
      %414 = vset.pattern.permute.xlu0 0
      %415 = vperm.xlu0 %414, %v395
      %v416 = vpop.permute.xlu0 %415
      %v418 = vmul.f32 %v411, %v416
      %v419 = vmul.f32 %v412, %v416
      %v420 = vpack.c.bf16 %v418, %v418
      %v421 = vpack.c.bf16 %v419, %v419
      %v422 = vld [vmem:[%s363] sm:$0x3]
      %s423 = scalar_lea.vmem %s363, 4
      %v424 = vld [vmem:[%s423] sm:$0x3]
      %v425 = vld [vmem:[%s363] sm:$0xf]
      %v426 = vld [vmem:[%s423] sm:$0xf]
      %s427 = scalar_lea.vmem %s363, 8
      %v428 = vld [vmem:[%s427] sm:$0x3]
      %s429 = scalar_lea.vmem %s363, 12
      %v430 = vld [vmem:[%s429] sm:$0x3]
      %v431 = vld [vmem:[%s427] sm:$0xf]
      %v432 = vld [vmem:[%s429] sm:$0xf]
      %v434 = vcombine.low %v424, %v424
      %v436 = vunpack.c.l.s4 1983009808
      %v437 = vunpack.c.0.s8 %v436
      %v438 = vlaneseq
      %v439 = vshrl.u32 %v438, 7
      %v440 = vsub.s32 %v437, %v439
      %v441 = vrot.slane %v434, %v440
      %v444 = vunpack.c.l.s4 1983009808
      %v445 = vunpack.c.0.s8 %v444
      %v446 = vlaneseq
      %v447 = vshrl.u32 %v446, 7
      %v448 = vsub.s32 %v445, %v447
      %v449 = vrot.slane %v425, %v448
      %v450 = vcombine.low %v449, %v449
      %451 = vrot.lane.b32.xlu0 %v450, 127
      %v452 = vpop.permute.xlu0 %451
      %453 = vrot.lane.b32.xlu0 %v449, 127
      %v454 = vpop.permute.xlu0 %453
      %vm455 = vcmask 1039360
      %v456 = vsel %vm455, %v452, %v454
      %v458 = vcombine.low %v426, %v426
      %v460 = vunpack.c.l.s4 1983009808
      %v461 = vunpack.c.0.s8 %v460
      %v462 = vlaneseq
      %v463 = vshrl.u32 %v462, 7
      %v464 = vsub.s32 %v461, %v463
      %v465 = vrot.slane %v458, %v464
      %v466 = vcombine.low %v465, %v465
      %467 = vrot.lane.b32.xlu0 %v466, 127
      %v468 = vpop.permute.xlu0 %467
      %469 = vrot.lane.b32.xlu0 %v465, 127
      %v470 = vpop.permute.xlu0 %469
      %v471 = vsel %vm455, %v468, %v470
      %v472 = vcombine.high %v449, %v449
      %473 = vrot.lane.b32.xlu0 %v449, 126
      %v474 = vpop.permute.xlu0 %473
      %475 = vrot.lane.b32.xlu0 %v472, 126
      %v476 = vpop.permute.xlu0 %475
      %vm477 = vcmask 1031168
      %v478 = vsel %vm477, %v474, %v476
      %v479 = vcombine.high %v465, %v465
      %480 = vrot.lane.b32.xlu0 %v465, 126
      %v481 = vpop.permute.xlu0 %480
      %482 = vrot.lane.b32.xlu0 %v479, 126
      %v483 = vpop.permute.xlu0 %482
      %v484 = vsel %vm477, %v481, %v483
      %v487 = vunpack.c.l.s4 1983009808
      %v488 = vunpack.c.0.s8 %v487
      %v489 = vlaneseq
      %v490 = vshrl.u32 %v489, 7
      %v491 = vsub.s32 %v488, %v490
      %v492 = vrot.slane %v428, %v491
      %v493 = vcombine.low %v492, %v492
      %v495 = vcombine.low %v430, %v430
      %v497 = vunpack.c.l.s4 1983009808
      %v498 = vunpack.c.0.s8 %v497
      %v499 = vlaneseq
      %v500 = vshrl.u32 %v499, 7
      %v501 = vsub.s32 %v498, %v500
      %v502 = vrot.slane %v495, %v501
      %v503 = vcombine.low %v502, %v502
      %v506 = vunpack.c.l.s4 1983009808
      %v507 = vunpack.c.0.s8 %v506
      %v508 = vlaneseq
      %v509 = vshrl.u32 %v508, 7
      %v510 = vsub.s32 %v507, %v509
      %v511 = vrot.slane %v431, %v510
      %v512 = vcombine.high %v511, %v511
      %513 = vrot.lane.b32.xlu0 %v511, 127
      %v514 = vpop.permute.xlu0 %513
      %515 = vrot.lane.b32.xlu0 %v512, 127
      %v516 = vpop.permute.xlu0 %515
      %v517 = vsel %vm455, %v514, %v516
      %v519 = vcombine.low %v432, %v432
      %v521 = vunpack.c.l.s4 1983009808
      %v522 = vunpack.c.0.s8 %v521
      %v523 = vlaneseq
      %v524 = vshrl.u32 %v523, 7
      %v525 = vsub.s32 %v522, %v524
      %v526 = vrot.slane %v519, %v525
      %v527 = vcombine.high %v526, %v526
      %528 = vrot.lane.b32.xlu0 %v526, 127
      %v529 = vpop.permute.xlu0 %528
      %530 = vrot.lane.b32.xlu0 %v527, 127
      %v531 = vpop.permute.xlu0 %530
      %v532 = vsel %vm455, %v529, %v531
      %v533 = vcombine.low %v511, %v511
      %534 = vrot.lane.b32.xlu0 %v533, 126
      %v535 = vpop.permute.xlu0 %534
      %536 = vrot.lane.b32.xlu0 %v511, 126
      %v537 = vpop.permute.xlu0 %536
      %v538 = vsel %vm477, %v535, %v537
      %v539 = vcombine.low %v526, %v526
      %540 = vrot.lane.b32.xlu0 %v539, 126
      %v541 = vpop.permute.xlu0 %540
      %542 = vrot.lane.b32.xlu0 %v526, 126
      %v543 = vpop.permute.xlu0 %542
      %v544 = vsel %vm477, %v541, %v543
      %545 = vrot.lane.b32.xlu0 %v449, 118
      %v546 = vpop.permute.xlu0 %545
      %547 = vrot.lane.b32.xlu0 %v472, 118
      %v548 = vpop.permute.xlu0 %547
      %vm549 = vcmask 965632
      %v550 = vsel %vm549, %v546, %v548
      %551 = vrot.lane.b32.xlu0 %v465, 118
      %v552 = vpop.permute.xlu0 %551
      %553 = vrot.lane.b32.xlu0 %v479, 118
      %v554 = vpop.permute.xlu0 %553
      %v555 = vsel %vm549, %v552, %v554
      %556 = vrot.lane.b32.xlu0 %v450, 117
      %v557 = vpop.permute.xlu0 %556
      %558 = vrot.lane.b32.xlu0 %v449, 117
      %v559 = vpop.permute.xlu0 %558
      %vm560 = vcmask 957440
      %v561 = vsel %vm560, %v557, %v559
      %562 = vrot.lane.b32.xlu0 %v466, 117
      %v563 = vpop.permute.xlu0 %562
      %564 = vrot.lane.b32.xlu0 %v465, 117
      %v565 = vpop.permute.xlu0 %564
      %v566 = vsel %vm560, %v563, %v565
      %vm567 = vcmask 1041408
      %v570 = vsel %vm567, %v422, %v441
      %vm571 = vcmask 1043456
      %v573 = vsel %vm571, %v570, %v456
      %vm574 = vcmask 1045504
      %v576 = vsel %vm574, %v573, %v471
      %v580 = vsel %vm567, %v478, %v484
      %v582 = vsel %vm571, %v580, %v493
      %v584 = vsel %vm574, %v582, %v503
      %v588 = vsel %vm567, %v517, %v532
      %v590 = vsel %vm571, %v588, %v538
      %v592 = vsel %vm574, %v590, %v544
      %v596 = vsel %vm567, %v550, %v555
      %v598 = vsel %vm571, %v596, %v561
      %v600 = vsel %vm574, %v598, %v566
      %602 = vrot.lane.b32.xlu0 %v533, 2
      %v603 = vpop.permute.xlu0 %602
      %604 = vrot.lane.b32.xlu0 %v511, 2
      %v605 = vpop.permute.xlu0 %604
      %vm606 = vcmask 15360
      %v607 = vsel %vm606, %v603, %v605
      %608 = vrot.lane.b32.xlu0 %v539, 2
      %v609 = vpop.permute.xlu0 %608
      %610 = vrot.lane.b32.xlu0 %v526, 2
      %v611 = vpop.permute.xlu0 %610
      %v612 = vsel %vm606, %v609, %v611
      %613 = vrot.lane.b32.xlu0 %v511, 1
      %v614 = vpop.permute.xlu0 %613
      %615 = vrot.lane.b32.xlu0 %v512, 1
      %v616 = vpop.permute.xlu0 %615
      %vm617 = vcmask 7168
      %v618 = vsel %vm617, %v614, %v616
      %619 = vrot.lane.b32.xlu0 %v526, 1
      %v620 = vpop.permute.xlu0 %619
      %621 = vrot.lane.b32.xlu0 %v527, 1
      %v622 = vpop.permute.xlu0 %621
      %v623 = vsel %vm617, %v620, %v622
      %624 = vrot.lane.b32.xlu0 %v449, 120
      %v625 = vpop.permute.xlu0 %624
      %626 = vrot.lane.b32.xlu0 %v472, 120
      %v627 = vpop.permute.xlu0 %626
      %vm628 = vcmask 982016
      %v629 = vsel %vm628, %v625, %v627
      %630 = vrot.lane.b32.xlu0 %v465, 120
      %v631 = vpop.permute.xlu0 %630
      %632 = vrot.lane.b32.xlu0 %v479, 120
      %v633 = vpop.permute.xlu0 %632
      %v634 = vsel %vm628, %v631, %v633
      %635 = vrot.lane.b32.xlu0 %v450, 119
      %v636 = vpop.permute.xlu0 %635
      %637 = vrot.lane.b32.xlu0 %v449, 119
      %v638 = vpop.permute.xlu0 %637
      %vm639 = vcmask 973824
      %v640 = vsel %vm639, %v636, %v638
      %641 = vrot.lane.b32.xlu0 %v466, 119
      %v642 = vpop.permute.xlu0 %641
      %643 = vrot.lane.b32.xlu0 %v465, 119
      %v644 = vpop.permute.xlu0 %643
      %v645 = vsel %vm639, %v642, %v644
      %646 = vrot.lane.b32.xlu0 %v533, 120
      %v647 = vpop.permute.xlu0 %646
      %648 = vrot.lane.b32.xlu0 %v511, 120
      %v649 = vpop.permute.xlu0 %648
      %v650 = vsel %vm628, %v647, %v649
      %651 = vrot.lane.b32.xlu0 %v539, 120
      %v652 = vpop.permute.xlu0 %651
      %653 = vrot.lane.b32.xlu0 %v526, 120
      %v654 = vpop.permute.xlu0 %653
      %v655 = vsel %vm628, %v652, %v654
      %v658 = vsel %vm567, %v449, %v465
      %v661 = vsel %vm567, %v472, %v479
      %v663 = vsel %vm571, %v658, %v603
      %v665 = vsel %vm571, %v661, %v607
      %v667 = vsel %vm574, %v663, %v609
      %v669 = vsel %vm574, %v665, %v612
      %v672 = vsel %vm567, %v614, %v620
      %v675 = vsel %vm567, %v618, %v623
      %v677 = vsel %vm571, %v672, %v533
      %v679 = vsel %vm571, %v675, %v511
      %v681 = vsel %vm574, %v677, %v539
      %v683 = vsel %vm574, %v679, %v526
      %v686 = vsel %vm567, %v629, %v634
      %v689 = vsel %vm567, %v627, %v633
      %v691 = vsel %vm571, %v686, %v640
      %v693 = vsel %vm571, %v689, %v638
      %v695 = vsel %vm574, %v691, %v645
      %v697 = vsel %vm574, %v693, %v644
      %v700 = vsel %vm567, %v548, %v554
      %v702 = vsel %vm571, %v596, %v650
      %v704 = vsel %vm571, %v700, %v649
      %v706 = vsel %vm574, %v702, %v655
      %v708 = vsel %vm574, %v704, %v654
      %709 = vrot.lane.b32.xlu0 %v533, 127
      %v710 = vpop.permute.xlu0 %709
      %v711 = vsel %vm455, %v710, %v514
      %712 = vrot.lane.b32.xlu0 %v539, 127
      %v713 = vpop.permute.xlu0 %712
      %v714 = vsel %vm455, %v713, %v529
      %v715 = vsel %vm567, %v511, %v526
      %v718 = vsel %vm567, %v512, %v527
      %v720 = vsel %vm571, %v715, %v711
      %v722 = vsel %vm571, %v718, %v514
      %v724 = vsel %vm574, %v720, %v714
      %v726 = vsel %vm574, %v722, %v529
      %735 = vrot.lane.b32.xlu0 %v667, 116
      %v736 = vpop.permute.xlu0 %735
      %737 = vrot.lane.b32.xlu0 %v669, 116
      %v738 = vpop.permute.xlu0 %737
      %739 = vrot.lane.b32.xlu0 %v681, 116
      %v740 = vpop.permute.xlu0 %739
      %741 = vrot.lane.b32.xlu0 %v683, 116
      %v742 = vpop.permute.xlu0 %741
      %743 = vrot.lane.b32.xlu0 %v695, 116
      %v744 = vpop.permute.xlu0 %743
      %745 = vrot.lane.b32.xlu0 %v697, 116
      %v746 = vpop.permute.xlu0 %745
      %747 = vrot.lane.b32.xlu0 %v706, 116
      %v748 = vpop.permute.xlu0 %747
      %749 = vrot.lane.b32.xlu0 %v708, 116
      %v750 = vpop.permute.xlu0 %749
      %vm751 = vcmask 949248
      %v752 = vsel %vm751, %v736, %v738
      %v753 = vsel %vm751, %v740, %v742
      %v754 = vsel %vm751, %v744, %v746
      %v755 = vsel %vm751, %v748, %v750
      %762 = vrot.lane.b32.xlu0 %v724, 107
      %v763 = vpop.permute.xlu0 %762
      %764 = vrot.lane.b32.xlu0 %v726, 107
      %v765 = vpop.permute.xlu0 %764
      %vm766 = vcmask 875520
      %v767 = vsel %vm766, %v763, %v765
      %s769 = sld [smem:[#allocation2]]
      %v770 = vld [vmem:[%s382] sm:$0x1]
      %v771 = vstv %s769
      %v772 = vmul.f32 %v771, %v770
      %v774 = vlaneseq
      %v775 = vshrl.u32 %v774, 7
      %v776 = vsub.s32 0, %v775
      %v777 = vrot.slane %v772, %v776
      %vm779 = vcmask 130048
      %v781 = vsel %vm779, %v421, 0
      %783 = vmatprep.subr.bf16.mxu0 0
      %784 = vmatpush1.bf16.msra.mxu0 %v755
      %785 = vmatprep.subr.bf16.mxu0 0
      %786 = vmatpush1.bf16.msra.mxu0 %v754
      %787 = vmatprep.subr.bf16.mxu0 0
      %788 = vmatpush1.bf16.msra.mxu0 %v753
      %789 = vmatprep.subr.bf16.mxu0 0
      %790 = vmatpush1.bf16.msra.mxu0 %v752
      %791 = vmatprep.subr.bf16.mxu0 0
      %792 = vmatpush1.bf16.msra.mxu0 %v600
      %793 = vmatprep.subr.bf16.mxu0 0
      %794 = vmatpush1.bf16.msra.mxu0 %v592
      %795 = vmatprep.subr.bf16.mxu0 0
      %796 = vmatpush1.bf16.msra.mxu0 %v584
      %797 = vmatprep.subr.bf16.mxu0 0
      %798 = vmatpush1.bf16.msra.mxu0 %v576
      %799 = vmatprep.subr.bf16.mxu0 0
      %800 = vmatpush2.bf16.msra.mxu0 0
      %801 = vmatprep.subr.bf16.mxu0 0
      %802 = vmatpush2.bf16.msra.mxu0 0
      %803 = vmatprep.subr.bf16.mxu0 0
      %804 = vmatpush2.bf16.msra.mxu0 0
      %805 = vmatprep.subr.bf16.mxu0 0
      %806 = vmatpush2.bf16.msra.mxu0 0
      %807 = vmatprep.subr.bf16.mxu0 0
      %808 = vmatpush2.bf16.msra.mxu0 0
      %809 = vmatprep.subr.bf16.mxu0 0
      %810 = vmatpush2.bf16.msra.mxu0 0
      %811 = vmatprep.subr.bf16.mxu0 0
      %812 = vmatpush2.bf16.msra.mxu0 0
      %813 = vmatprep.subr.bf16.mxu0 0
      %814 = vmatpush2.bf16.msra.mxu0 %v767
      %815 = vmatprep.mubr.bf16.mxu0 %v781
      %816 = vmatmul.mubr.bf16.gmra.mxu0 %v420
      %v817 = vpop.f32.mrf.mxu0
      %v818 = vadd.f32 %v777, %v817
      %v819 = vpop.f32.mrf.mxu0
      %v820 = vpop.f32.mrf.mxu0
      %v821 = vpop.f32.mrf.mxu0
      %822 = vdwg.mxu0
      %v823 = vld [vmem:[%s386] sm:$0xff]
      %825 = vset.pattern.permute.xlu0 0
      %826 = vperm.xlu0 %825, %v823
      %v827 = vpop.permute.xlu0 %826
      %v829 = vadd.f32 %v818, %v827
      %vm830 = vcmp.ge.f32.partialorder %v829, 0.0
      %v831 = vmul.f32 %v829, 0.2
      %v832 = vsel %vm830, %v829, %v831
      %v833 = vmul.f32 %v832, 1.4142135
      %834 = vst [vmem:[%s393] sm:$0xff] %v833
      %p835 = scmp.lt.s32.totalorder %s24, 1
      %s836 = scalar_select %p835, %s24, 1
      %p837 = scmp.lt.s32.totalorder %s23, 0
      %s838 = scalar_select %p837, %s23, 0
      %s839 = sadd.s32 %s838, %s836
      %s840 = smul.addr %s839, 8
      %s841 = scalar_lea.vmem %s7, %s840
      // Predicated region
      $region49: #{styled_conv_down.1} parent=47 // pred_check
        %p842 = pneg %p230
      $region50: #{styled_conv_down.1} parent=47 // pred_check_branch
        %844 = sbr.rel (%p842) target = $region52
      $region51: #{styled_conv_down.1} parent=47 // pred_region
        _
      $region52: #{styled_conv_down.1} parent=47 // pred_fallthru
        _
    $region48: #{styled_conv_down.1} parent=5 // pred_fallthru
      _
    %p845 = scmp.le.s32.totalorder 2, %s14
    // Predicated region
    $region53: #{styled_conv_down.1} parent=5 // pred_check
      %p846 = pneg %p845
    $region54: #{styled_conv_down.1} parent=5 // pred_check_branch
      %848 = sbr.rel (%p846) target = $region56
    $region55: #{styled_conv_down.1} parent=5 // pred_region
      %s849 = ssub.s32 %s14, 2
      // Predicated region
      $region57: #{styled_conv_down.1} parent=55 // pred_check
        %p850 = pneg %p236
      $region58: #{styled_conv_down.1} parent=55 // pred_check_branch
        %852 = sbr.rel (%p850) target = $region60
      $region59: #{styled_conv_down.1} parent=55 // pred_region
        %p853 = scmp.lt.s32.totalorder %s26, 1
        %s854 = scalar_select %p853, %s26, 1
        %p855 = scmp.lt.s32.totalorder %s25, 0
        %s856 = scalar_select %p855, %s25, 0
        %s857 = sadd.s32 %s856, %s854
        %s858 = smul.addr %s857, 8
        %s859 = scalar_lea.vmem %s7, %s858
      $region60: #{styled_conv_down.1} parent=55 // pred_fallthru
        _
    $region56: #{styled_conv_down.1} parent=5 // pred_fallthru
      _
  $region6: #{styled_conv_down.1} parent=0 // loop_footer
    %s18 = sadd.s32 1, %s14
  $region7: #{styled_conv_down.1} parent=0 // loop_footer_branch
    %13 = sbr.rel target = $region3
  $region8: #{styled_conv_down.1} parent=0 // loop_exit
    _

</llo_original>
